<compile_context>
chip_gen: v7x
topology: tpu7x:2x2x1
jax: 0.10.0
libtpu: 0.0.40
codegen_flags: <defaults>
</compile_context>

<pallas_src>
import jax
import jax.numpy as jnp
from jax.experimental import pallas as pl
from jax.experimental.pallas import tpu as pltpu


def _round_up(x, m):
    return (x + m - 1) // m * m


# Conservative per-grid-step VMEM budget (fits v5e's 16 MiB scoped default and
# leaves ample headroom under v7x's 64 MiB physical VMEM).
_VMEM_BUDGET = 12 * 1024 * 1024


def _vmem_estimate(t_block, b_block, i_pad, h_pad):
    x_blk = t_block * b_block * i_pad * 4 * 2          # f32 input block, 2 bufs
    o_blk = t_block * b_block * h_pad * 4 * 2          # f32 output block, 2 bufs
    w_res = i_pad * h_pad * 2 * 2                      # bf16 W_ih (resident, 2 bufs)
    w_res += h_pad * h_pad * 4 * 2                     # f32  W_hh (resident, 2 bufs)
    w_res += h_pad * 4 * 2                             # bias
    h_scr = b_block * h_pad * 4                        # carried hidden state
    return x_blk + o_blk + w_res + h_scr


def _megacore():
    """True only on chips that expose 2 TensorCores behind one JAX device."""
    try:
        kind = jax.devices()[0].device_kind.lower()
    except Exception:
        return False
    return ("v4" in kind) or ("v5p" in kind) or ("v7" in kind)


def _pick_time_block(seq_len, max_tb):
    """Largest t_block <= max_tb dividing seq_len (no wasted serial steps);
    fall back to time padding only if every divisor is tiny."""
    max_tb = max(1, min(max_tb, seq_len))
    for tb in range(max_tb, 0, -1):
        if seq_len % tb == 0:
            if 2 * tb >= max_tb:
                return tb, seq_len
            break
    return max_tb, _round_up(seq_len, max_tb)


# ---------------------------------------------------------------------------
# Fused kernel: input projection (prologue, MXU-friendly) + serial recurrence
# ---------------------------------------------------------------------------
def _make_fused_rnn_kernel(t_block):
    def kernel(x_ref, wih_ref, whh_ref, bias_ref, o_ref, h_ref):
        # x_ref:    (t_block, B_blk, I_pad) f32   input slice for this block
        # wih_ref:  (I_pad, H_pad)          bf16  W_ih^T (resident)
        # whh_ref:  (H_pad, H_pad)          f32   W_hh^T (resident)
        # bias_ref: (1, H_pad)              f32   b_ih + b_hh
        # o_ref:    (t_block, B_blk, H_pad) f32   output block (also used as
        #                                         staging for `pre`)
        # h_ref:    (B_blk, H_pad)          f32   VMEM-carried hidden state
        _, b_blk, i_pad = x_ref.shape
        h_pad = o_ref.shape[-1]
        t_id = pl.program_id(1)

        @pl.when(t_id == 0)
        def _():
            # hidden0 = torch.zeros(num_layers, batch, hidden)
            h_ref[...] = jnp.zeros_like(h_ref)

        # --- fused, hoisted input projection for the whole time block -------
        # One big (t_block*B_blk, I_pad) x (I_pad, H_pad) MXU matmul; the f32
        # reshape merging (t, b) is layout-free since b_blk % 8 == 0.
        x2d = x_ref[...].reshape(t_block * b_blk, i_pad).astype(jnp.bfloat16)
        pre = jnp.dot(x2d, wih_ref[...], preferred_element_type=jnp.float32)
        pre = pre + bias_ref[...]
        o_ref[...] = pre.reshape(t_block, b_blk, h_pad)

        # --- serial recurrence: h_t = tanh(pre_t + h_{t-1} @ W_hh^T) --------
        def step(i, h):
            # Do not hoist whh_ref[...] into a value: the MXU streams the
            # resident weight from VMEM; re-reading the ref per step is free.
            z = o_ref[i] + jnp.dot(h, whh_ref[...],
                                   preferred_element_type=jnp.float32)
            h_new = jnp.tanh(z)               # f32 tanh on the EUP
            o_ref[i] = h_new
            return h_new

        h_ref[...] = jax.lax.fori_loop(
            0, t_block, step, h_ref[...],
            unroll=True if t_block <= 32 else 8,
        )

    return kernel


# ---------------------------------------------------------------------------
# Forward wrapper (padding / layout plumbing + one pallas_call)
# ---------------------------------------------------------------------------
def rnn_forward(inputs, w_ih, w_hh, b_ih, b_hh, *, t_block=32):
    """inputs: (seq_len, batch, input_size) f32 -> (seq_len*batch, hidden)."""
    seq_len, batch, input_size = inputs.shape
    hidden_size = w_ih.shape[0]

    b_pad = _round_up(batch, 8)           # f32 sublane granule
    h_pad = _round_up(hidden_size, 128)   # lane-dense outputs / W_hh
    i_pad = _round_up(input_size, 128)

    # Only split batch across blocks on megacore chips (2 TCs behind 1 device).
    split = _megacore() and b_pad >= 16 and b_pad % 16 == 0
    b_block = b_pad // 2 if split else b_pad

    # Time-block selection: VMEM clamp first, then prefer a divisor of seq_len.
    tb = max(1, min(t_block, seq_len))
    while tb > 1 and _vmem_estimate(tb, b_block, i_pad, h_pad) > _VMEM_BUDGET:
        tb //= 2
    t_blk, t_pad = _pick_time_block(seq_len, tb)

    # --- pad + cast operands (zero padding is inert for valid rows/cols) ----
    x = jnp.zeros((t_pad, b_pad, i_pad), jnp.float32)
    x = x.at[:seq_len, :batch, :input_size].set(jnp.asarray(inputs, jnp.float32))

    wih_t = jnp.zeros((i_pad, h_pad), jnp.float32)
    wih_t = wih_t.at[:input_size, :hidden_size].set(
        jnp.asarray(w_ih, jnp.float32).T).astype(jnp.bfloat16)

    whh_t = jnp.zeros((h_pad, h_pad), jnp.float32)
    whh_t = whh_t.at[:hidden_size, :hidden_size].set(jnp.asarray(w_hh, jnp.float32).T)

    bias = jnp.zeros((1, h_pad), jnp.float32)
    bias = bias.at[0, :hidden_size].set(
        jnp.asarray(b_ih, jnp.float32) + jnp.asarray(b_hh, jnp.float32))

    grid = (b_pad // b_block, t_pad // t_blk)

    out_pad = pl.pallas_call(
        _make_fused_rnn_kernel(t_blk),
        out_shape=jax.ShapeDtypeStruct((t_pad, b_pad, h_pad), jnp.float32),
        grid_spec=pltpu.PrefetchScalarGridSpec(
            num_scalar_prefetch=0,
            grid=grid,
            in_specs=[
                pl.BlockSpec((t_blk, b_block, i_pad), lambda b, t: (t, b, 0)),
                pl.BlockSpec((i_pad, h_pad), lambda b, t: (0, 0)),   # resident
                pl.BlockSpec((h_pad, h_pad), lambda b, t: (0, 0)),   # resident
                pl.BlockSpec((1, h_pad), lambda b, t: (0, 0)),       # resident
            ],
            out_specs=pl.BlockSpec((t_blk, b_block, h_pad), lambda b, t: (t, b, 0)),
            scratch_shapes=[pltpu.VMEM((b_block, h_pad), jnp.float32)],
        ),
        compiler_params=pltpu.CompilerParams(
            # batch blocks are independent -> parallel (per-core VMEM scratch);
            # time carries state in the scratch -> arbitrary (sequential).
            dimension_semantics=("parallel", "arbitrary"),
        ),
    )(x, wih_t, whh_t, bias)

    # strip padding, then out.view(-1, hidden_size)
    out = out_pad[:seq_len, :batch, :hidden_size]
    return out.reshape(seq_len * batch, hidden_size)


def init_params(key, input_size, hidden_size):
    """torch.nn.RNN-style init: U(-1/sqrt(H), 1/sqrt(H)) for all params."""
    k1, k2, k3, k4 = jax.random.split(key, 4)
    bound = 1.0 / (hidden_size ** 0.5)
    w_ih = jax.random.uniform(k1, (hidden_size, input_size), jnp.float32, -bound, bound)
    w_hh = jax.random.uniform(k2, (hidden_size, hidden_size), jnp.float32, -bound, bound)
    b_ih = jax.random.uniform(k3, (hidden_size,), jnp.float32, -bound, bound)
    b_hh = jax.random.uniform(k4, (hidden_size,), jnp.float32, -bound, bound)
    return w_ih, w_hh, b_ih, b_hh


def rnn_reference(inputs, w_ih, w_hh, b_ih, b_hh):
    """Pure-JAX reference mirroring the kernel numerics (bf16 projection
    operands with f32 accumulation; f32 recurrent matmul / bias / tanh)."""
    wih_t = jnp.asarray(w_ih, jnp.float32).T.astype(jnp.bfloat16)
    whh_t = jnp.asarray(w_hh, jnp.float32).T
    bias = jnp.asarray(b_ih, jnp.float32) + jnp.asarray(b_hh, jnp.float32)
    batch = inputs.shape[1]
    hidden = w_ih.shape[0]

    x = jnp.asarray(inputs, jnp.float32).astype(jnp.bfloat16)
    pre = jnp.einsum("tbi,ih->tbh", x, wih_t,
                     preferred_element_type=jnp.float32) + bias

    def step(h, p):
        h_new = jnp.tanh(p + h @ whh_t)
        return h_new, h_new

    h0 = jnp.zeros((batch, hidden), jnp.float32)
    _, outs = jax.lax.scan(step, h0, pre)
    return outs.reshape(-1, hidden)


if __name__ == "__main__":
    # ---- Test 1: the exact shapes of the PyTorch script ---------------------
    batch_size = 1
    hidden_size = 4
    input_size = 4
    seq_len = 5

    one_hot_lookup = [[1, 0, 0, 0], [0, 1, 0, 0], [0, 0, 1, 0], [0, 0, 0, 1]]
    x_data = [1, 0, 2, 3, 3]
    x_one_hot = [one_hot_lookup[x] for x in x_data]
    inputs = jnp.asarray(x_one_hot, jnp.float32).reshape(seq_len, batch_size, input_size)

    key = jax.random.PRNGKey(0)
    w_ih, w_hh, b_ih, b_hh = init_params(key, input_size, hidden_size)

    out = rnn_forward(inputs, w_ih, w_hh, b_ih, b_hh)
    out = jax.block_until_ready(out)
    assert out.shape == (seq_len * batch_size, hidden_size), out.shape

    ref_out = rnn_reference(inputs, w_ih, w_hh, b_ih, b_hh)
    assert jnp.allclose(out, ref_out, atol=2e-3, rtol=2e-3), (out, ref_out)

    # ---- Test 2: larger shapes exercising multi-block time + padding --------
    seq2, batch2, in2, hid2 = 40, 4, 16, 32
    k_in, k_p = jax.random.split(jax.random.PRNGKey(1))
    inputs2 = jax.random.normal(k_in, (seq2, batch2, in2), jnp.float32)
    params2 = init_params(k_p, in2, hid2)

    out2 = rnn_forward(inputs2, *params2, t_block=16)
    out2 = jax.block_until_ready(out2)
    assert out2.shape == (seq2 * batch2, hid2), out2.shape

    ref2 = rnn_reference(inputs2, *params2)
    assert jnp.allclose(out2, ref2, atol=2e-3, rtol=2e-3), float(
        jnp.max(jnp.abs(out2 - ref2)))

    print("KERNEL_OK")
</pallas_src>

<mosaic_0001>
module attributes {stable_mosaic.version = 11 : i64} {
  func.func @kernel(%arg0: i32, %arg1: i32, %arg2: memref<5x8x128xf32, #tpu.memory_space<vmem>>, %arg3: memref<128x128xbf16, #tpu.memory_space<vmem>>, %arg4: memref<128x128xf32, #tpu.memory_space<vmem>>, %arg5: memref<1x128xf32, #tpu.memory_space<vmem>>, %arg6: memref<5x8x128xf32, #tpu.memory_space<vmem>>, %arg7: memref<8x128xf32, #tpu.memory_space<vmem>>) attributes {dimension_semantics = [#tpu.dimension_semantics<parallel>, #tpu.dimension_semantics<arbitrary>], iteration_bounds = array<i64: 1, 1>, scalar_prefetch = 0 : i64, scratch_operands = 1 : i64, tpu.core_type = #tpu.core_type<tc>, window_params = [{transform_indices = @transform_0, window_bounds = array<i64: 5, 8, 128>}, {pipeline_mode = #tpu.pipeline_mode<synchronous>, transform_indices = @transform_1, window_bounds = array<i64: 128, 128>}, {pipeline_mode = #tpu.pipeline_mode<synchronous>, transform_indices = @transform_2, window_bounds = array<i64: 128, 128>}, {pipeline_mode = #tpu.pipeline_mode<synchronous>, transform_indices = @transform_3, window_bounds = array<i64: 1, 128>}, {transform_indices = @transform_4, window_bounds = array<i64: 5, 8, 128>}]} {
    %c0_i32 = arith.constant 0 : i32
    %0 = arith.cmpi eq, %arg1, %c0_i32 : i32
    %1 = arith.extui %0 : i1 to i32
    %c0_i32_0 = arith.constant 0 : i32
    %2 = arith.cmpi ne, %1, %c0_i32_0 : i32
    scf.if %2 {
      %cst_50 = arith.constant 0.000000e+00 : f32
      %70 = vector.broadcast %cst_50 : f32 to vector<8x128xf32>
      %c0_51 = arith.constant 0 : index
      %c0_52 = arith.constant 0 : index
      %71 = vector.load %arg7[%c0_51, %c0_52] : memref<8x128xf32, #tpu.memory_space<vmem>>, vector<8x128xf32>
      tpu.vector_store %arg7[%c0_51, %c0_52], %70 {strides = array<i32>} : memref<8x128xf32, #tpu.memory_space<vmem>>, vector<8x128xf32>,
    } else {
    }
    %c0 = arith.constant 0 : index
    %c0_1 = arith.constant 0 : index
    %c0_2 = arith.constant 0 : index
    %3 = vector.load %arg2[%c0, %c0_1, %c0_2] : memref<5x8x128xf32, #tpu.memory_space<vmem>>, vector<5x8x128xf32>
    %4 = vector.shape_cast %3 : vector<5x8x128xf32> to vector<40x128xf32>
    %5 = arith.truncf %4 : vector<40x128xf32> to vector<40x128xbf16>
    %c0_3 = arith.constant 0 : index
    %c0_4 = arith.constant 0 : index
    %6 = vector.load %arg3[%c0_3, %c0_4] : memref<128x128xbf16, #tpu.memory_space<vmem>>, vector<128x128xbf16>
    %cst = arith.constant dense<0.000000e+00> : vector<40x128xf32>
    %7 = tpu.matmul %5, %6, %cst {dimension_numbers = #tpu.dot_dimension_numbers<[1], [0], [0], [1], [0, 0, 1, 1], [], []>} : vector<40x128xbf16>, vector<128x128xbf16>, vector<40x128xf32> -> vector<40x128xf32>
    %c0_5 = arith.constant 0 : index
    %c0_6 = arith.constant 0 : index
    %8 = vector.load %arg5[%c0_5, %c0_6] : memref<1x128xf32, #tpu.memory_space<vmem>>, vector<1x128xf32>
    %9 = vector.broadcast %8 : vector<1x128xf32> to vector<40x128xf32>
    %10 = arith.addf %7, %9 : vector<40x128xf32>
    %11 = vector.shape_cast %10 : vector<40x128xf32> to vector<5x8x128xf32>
    %c0_7 = arith.constant 0 : index
    %c0_8 = arith.constant 0 : index
    %c0_9 = arith.constant 0 : index
    %12 = vector.load %arg6[%c0_7, %c0_8, %c0_9] : memref<5x8x128xf32, #tpu.memory_space<vmem>>, vector<5x8x128xf32>
    tpu.vector_store %arg6[%c0_7, %c0_8, %c0_9], %11 {strides = array<i32>} : memref<5x8x128xf32, #tpu.memory_space<vmem>>, vector<5x8x128xf32>,
    %c0_10 = arith.constant 0 : index
    %c0_11 = arith.constant 0 : index
    %13 = vector.load %arg7[%c0_10, %c0_11] : memref<8x128xf32, #tpu.memory_space<vmem>>, vector<8x128xf32>
    %c0_i32_12 = arith.constant 0 : i32
    %14 = arith.index_cast %c0_i32_12 : i32 to index
    %c0_13 = arith.constant 0 : index
    %c0_14 = arith.constant 0 : index
    %15 = vector.load %arg6[%14, %c0_13, %c0_14] : memref<5x8x128xf32, #tpu.memory_space<vmem>>, vector<1x8x128xf32>
    %16 = vector.shape_cast %15 : vector<1x8x128xf32> to vector<8x128xf32>
    %c0_15 = arith.constant 0 : index
    %c0_16 = arith.constant 0 : index
    %17 = vector.load %arg4[%c0_15, %c0_16] : memref<128x128xf32, #tpu.memory_space<vmem>>, vector<128x128xf32>
    %cst_17 = arith.constant dense<0.000000e+00> : vector<8x128xf32>
    %18 = tpu.matmul %13, %17, %cst_17 {dimension_numbers = #tpu.dot_dimension_numbers<[1], [0], [0], [1], [0, 0, 1, 1], [], []>} : vector<8x128xf32>, vector<128x128xf32>, vector<8x128xf32> -> vector<8x128xf32>
    %19 = arith.addf %16, %18 : vector<8x128xf32>
    %20 = math.tanh %19 : vector<8x128xf32>
    %21 = arith.index_cast %c0_i32_12 : i32 to index
    %c0_18 = arith.constant 0 : index
    %c0_19 = arith.constant 0 : index
    %22 = vector.load %arg6[%21, %c0_18, %c0_19] : memref<5x8x128xf32, #tpu.memory_space<vmem>>, vector<1x8x128xf32>
    %23 = vector.shape_cast %22 : vector<1x8x128xf32> to vector<8x128xf32>
    %24 = vector.shape_cast %20 : vector<8x128xf32> to vector<1x8x128xf32>
    tpu.vector_store %arg6[%21, %c0_18, %c0_19], %24 {strides = array<i32>} : memref<5x8x128xf32, #tpu.memory_space<vmem>>, vector<1x8x128xf32>,
    %c1_i32 = arith.constant 1 : i32
    %25 = arith.index_cast %c1_i32 : i32 to index
    %c0_20 = arith.constant 0 : index
    %c0_21 = arith.constant 0 : index
    %26 = vector.load %arg6[%25, %c0_20, %c0_21] : memref<5x8x128xf32, #tpu.memory_space<vmem>>, vector<1x8x128xf32>
    %27 = vector.shape_cast %26 : vector<1x8x128xf32> to vector<8x128xf32>
    %c0_22 = arith.constant 0 : index
    %c0_23 = arith.constant 0 : index
    %28 = vector.load %arg4[%c0_22, %c0_23] : memref<128x128xf32, #tpu.memory_space<vmem>>, vector<128x128xf32>
    %cst_24 = arith.constant dense<0.000000e+00> : vector<8x128xf32>
    %29 = tpu.matmul %20, %28, %cst_24 {dimension_numbers = #tpu.dot_dimension_numbers<[1], [0], [0], [1], [0, 0, 1, 1], [], []>} : vector<8x128xf32>, vector<128x128xf32>, vector<8x128xf32> -> vector<8x128xf32>
    %30 = arith.addf %27, %29 : vector<8x128xf32>
    %31 = math.tanh %30 : vector<8x128xf32>
    %32 = arith.index_cast %c1_i32 : i32 to index
    %c0_25 = arith.constant 0 : index
    %c0_26 = arith.constant 0 : index
    %33 = vector.load %arg6[%32, %c0_25, %c0_26] : memref<5x8x128xf32, #tpu.memory_space<vmem>>, vector<1x8x128xf32>
    %34 = vector.shape_cast %33 : vector<1x8x128xf32> to vector<8x128xf32>
    %35 = vector.shape_cast %31 : vector<8x128xf32> to vector<1x8x128xf32>
    tpu.vector_store %arg6[%32, %c0_25, %c0_26], %35 {strides = array<i32>} : memref<5x8x128xf32, #tpu.memory_space<vmem>>, vector<1x8x128xf32>,
    %c2_i32 = arith.constant 2 : i32
    %36 = arith.index_cast %c2_i32 : i32 to index
    %c0_27 = arith.constant 0 : index
    %c0_28 = arith.constant 0 : index
    %37 = vector.load %arg6[%36, %c0_27, %c0_28] : memref<5x8x128xf32, #tpu.memory_space<vmem>>, vector<1x8x128xf32>
    %38 = vector.shape_cast %37 : vector<1x8x128xf32> to vector<8x128xf32>
    %c0_29 = arith.constant 0 : index
    %c0_30 = arith.constant 0 : index
    %39 = vector.load %arg4[%c0_29, %c0_30] : memref<128x128xf32, #tpu.memory_space<vmem>>, vector<128x128xf32>
    %cst_31 = arith.constant dense<0.000000e+00> : vector<8x128xf32>
    %40 = tpu.matmul %31, %39, %cst_31 {dimension_numbers = #tpu.dot_dimension_numbers<[1], [0], [0], [1], [0, 0, 1, 1], [], []>} : vector<8x128xf32>, vector<128x128xf32>, vector<8x128xf32> -> vector<8x128xf32>
    %41 = arith.addf %38, %40 : vector<8x128xf32>
    %42 = math.tanh %41 : vector<8x128xf32>
    %43 = arith.index_cast %c2_i32 : i32 to index
    %c0_32 = arith.constant 0 : index
    %c0_33 = arith.constant 0 : index
    %44 = vector.load %arg6[%43, %c0_32, %c0_33] : memref<5x8x128xf32, #tpu.memory_space<vmem>>, vector<1x8x128xf32>
    %45 = vector.shape_cast %44 : vector<1x8x128xf32> to vector<8x128xf32>
    %46 = vector.shape_cast %42 : vector<8x128xf32> to vector<1x8x128xf32>
    tpu.vector_store %arg6[%43, %c0_32, %c0_33], %46 {strides = array<i32>} : memref<5x8x128xf32, #tpu.memory_space<vmem>>, vector<1x8x128xf32>,
    %c3_i32 = arith.constant 3 : i32
    %47 = arith.index_cast %c3_i32 : i32 to index
    %c0_34 = arith.constant 0 : index
    %c0_35 = arith.constant 0 : index
    %48 = vector.load %arg6[%47, %c0_34, %c0_35] : memref<5x8x128xf32, #tpu.memory_space<vmem>>, vector<1x8x128xf32>
    %49 = vector.shape_cast %48 : vector<1x8x128xf32> to vector<8x128xf32>
    %c0_36 = arith.constant 0 : index
    %c0_37 = arith.constant 0 : index
    %50 = vector.load %arg4[%c0_36, %c0_37] : memref<128x128xf32, #tpu.memory_space<vmem>>, vector<128x128xf32>
    %cst_38 = arith.constant dense<0.000000e+00> : vector<8x128xf32>
    %51 = tpu.matmul %42, %50, %cst_38 {dimension_numbers = #tpu.dot_dimension_numbers<[1], [0], [0], [1], [0, 0, 1, 1], [], []>} : vector<8x128xf32>, vector<128x128xf32>, vector<8x128xf32> -> vector<8x128xf32>
    %52 = arith.addf %49, %51 : vector<8x128xf32>
    %53 = math.tanh %52 : vector<8x128xf32>
    %54 = arith.index_cast %c3_i32 : i32 to index
    %c0_39 = arith.constant 0 : index
    %c0_40 = arith.constant 0 : index
    %55 = vector.load %arg6[%54, %c0_39, %c0_40] : memref<5x8x128xf32, #tpu.memory_space<vmem>>, vector<1x8x128xf32>
    %56 = vector.shape_cast %55 : vector<1x8x128xf32> to vector<8x128xf32>
    %57 = vector.shape_cast %53 : vector<8x128xf32> to vector<1x8x128xf32>
    tpu.vector_store %arg6[%54, %c0_39, %c0_40], %57 {strides = array<i32>} : memref<5x8x128xf32, #tpu.memory_space<vmem>>, vector<1x8x128xf32>,
    %c4_i32 = arith.constant 4 : i32
    %58 = arith.index_cast %c4_i32 : i32 to index
    %c0_41 = arith.constant 0 : index
    %c0_42 = arith.constant 0 : index
    %59 = vector.load %arg6[%58, %c0_41, %c0_42] : memref<5x8x128xf32, #tpu.memory_space<vmem>>, vector<1x8x128xf32>
    %60 = vector.shape_cast %59 : vector<1x8x128xf32> to vector<8x128xf32>
    %c0_43 = arith.constant 0 : index
    %c0_44 = arith.constant 0 : index
    %61 = vector.load %arg4[%c0_43, %c0_44] : memref<128x128xf32, #tpu.memory_space<vmem>>, vector<128x128xf32>
    %cst_45 = arith.constant dense<0.000000e+00> : vector<8x128xf32>
    %62 = tpu.matmul %53, %61, %cst_45 {dimension_numbers = #tpu.dot_dimension_numbers<[1], [0], [0], [1], [0, 0, 1, 1], [], []>} : vector<8x128xf32>, vector<128x128xf32>, vector<8x128xf32> -> vector<8x128xf32>
    %63 = arith.addf %60, %62 : vector<8x128xf32>
    %64 = math.tanh %63 : vector<8x128xf32>
    %65 = arith.index_cast %c4_i32 : i32 to index
    %c0_46 = arith.constant 0 : index
    %c0_47 = arith.constant 0 : index
    %66 = vector.load %arg6[%65, %c0_46, %c0_47] : memref<5x8x128xf32, #tpu.memory_space<vmem>>, vector<1x8x128xf32>
    %67 = vector.shape_cast %66 : vector<1x8x128xf32> to vector<8x128xf32>
    %68 = vector.shape_cast %64 : vector<8x128xf32> to vector<1x8x128xf32>
    tpu.vector_store %arg6[%65, %c0_46, %c0_47], %68 {strides = array<i32>} : memref<5x8x128xf32, #tpu.memory_space<vmem>>, vector<1x8x128xf32>,
    %c5_i32 = arith.constant 5 : i32
    %c0_48 = arith.constant 0 : index
    %c0_49 = arith.constant 0 : index
    %69 = vector.load %arg7[%c0_48, %c0_49] : memref<8x128xf32, #tpu.memory_space<vmem>>, vector<8x128xf32>
    tpu.vector_store %arg7[%c0_48, %c0_49], %64 {strides = array<i32>} : memref<8x128xf32, #tpu.memory_space<vmem>>, vector<8x128xf32>,
    return
  }
  func.func @transform_0(%arg0: i32, %arg1: i32) -> (i32, i32, i32) {
    %c0_i32 = arith.constant 0 : i32
    %c0_i32_0 = arith.constant 0 : i32
    return %arg1, %arg0, %c0_i32 : i32, i32, i32
  }
  func.func @transform_1(%arg0: i32, %arg1: i32) -> (i32, i32) {
    %c0_i32 = arith.constant 0 : i32
    %c0_i32_0 = arith.constant 0 : i32
    %c0_i32_1 = arith.constant 0 : i32
    return %c0_i32, %c0_i32_0 : i32, i32
  }
  func.func @transform_2(%arg0: i32, %arg1: i32) -> (i32, i32) {
    %c0_i32 = arith.constant 0 : i32
    %c0_i32_0 = arith.constant 0 : i32
    %c0_i32_1 = arith.constant 0 : i32
    return %c0_i32, %c0_i32_0 : i32, i32
  }
  func.func @transform_3(%arg0: i32, %arg1: i32) -> (i32, i32) {
    %c0_i32 = arith.constant 0 : i32
    %c0_i32_0 = arith.constant 0 : i32
    %c0_i32_1 = arith.constant 0 : i32
    return %c0_i32, %c0_i32_0 : i32, i32
  }
  func.func @transform_4(%arg0: i32, %arg1: i32) -> (i32, i32, i32) {
    %c0_i32 = arith.constant 0 : i32
    %c0_i32_0 = arith.constant 0 : i32
    return %arg1, %arg0, %c0_i32 : i32, i32, i32
  }
}

</mosaic_0001>

<llo_original>
// kernel: tpu_custom_call.1
$region0: #{tpu_custom_call.1}
  #allocation0 [shape = 'u32[]', space=smem, size = 0x4, offset = 0x4, fixed_abs, tag = 'smem constant byte address 0x4 - core index']
  #allocation1 [shape = 'u32[144,128]{1,0:T(1,128)}', space=vmem, size = 0x12000, scoped, tag = 'internal scratch']
  #allocation2 [shape = 'f32[8,128]{1,0:T(8,128)}', space=vmem, size = 0x1000, scoped, tag = 'scratch operand']
  %s0 = inlined_call_operand.hbm [shape: f32[5,8,128], index: 0, kind: input, shape index: {}]
  %s1 = inlined_call_operand.hbm [shape: bf16[128,128], index: 1, kind: input, shape index: {}]
  %s2 = inlined_call_operand.hbm [shape: f32[128,128], index: 2, kind: input, shape index: {}]
  %s3 = inlined_call_operand.vmem [shape: f32[1,128], index: 3, kind: input, shape index: {}]
  %s4 = inlined_call_operand.hbm [shape: f32[5,8,128], index: 4, kind: output, shape index: {}]
  %s5 = sld [smem:[#allocation0]]
  $region42: #{tpu_custom_call.1} parent=0
    _
  %s7 = ssub.s32 1, %s5
  %s8 = scalar_select 0, %s7, %s5
  $region1: #{tpu_custom_call.1} parent=0
    #allocation3 [shape = 'u8[20480]{0}', space=vmem, size = 0x5000, scoped, tag = 'input window, operand 0, single buffered']
    #allocation4 [shape = 's32[1]{0}', space=sflag, size = 0x4, scoped, tag = 'scoped memory for tpu_custom_call.1']
    #allocation5 [shape = 's32[1]{0}', space=sflag, size = 0x4, scoped, tag = 'scoped memory for tpu_custom_call.1']
    #allocation6 [shape = 'u8[32768]{0}', space=vmem, size = 0x8000, scoped, tag = 'input window, operand 1, single buffered']
    #allocation7 [shape = 's32[1]{0}', space=sflag, size = 0x4, scoped, tag = 'scoped memory for tpu_custom_call.1']
    #allocation8 [shape = 'u8[65536]{0}', space=vmem, size = 0x10000, scoped, tag = 'input window, operand 2, single buffered']
    #allocation9 [shape = 'u8[20480]{0}', space=vmem, size = 0x5000, scoped, tag = 'output window, operand 0, single buffered']
    %9 = vsyncpa [#allocation4], 0
    %10 = vsyncpa [#allocation7], 0
    %11 = vsyncpa [#allocation5], 0
    // Predicated region
    $region2: #{tpu_custom_call.1} parent=1 // pred_check
      _
    $region3: #{tpu_custom_call.1} parent=1 // pred_check_branch
      %13 = sbr.rel (0) target = $region5
    $region4: #{tpu_custom_call.1} parent=1 // pred_region
      %s15 = ssub.s32 640, 640
      %16 = vsyncadd [#allocation4], %s15
      %s17 = sshll.u32 [#allocation3], 4
      %s18 = int_to_ptr.vmem [resolvable:$true] %s17
      %23 = dma.hbm_to_vmem [thread:$0]  %s0, 640, %s18, [#allocation4], 128, 128, 8
    $region5: #{tpu_custom_call.1} parent=1 // pred_fallthru
      _
    // Predicated region
    $region6: #{tpu_custom_call.1} parent=1 // pred_check
      _
    $region7: #{tpu_custom_call.1} parent=1 // pred_check_branch
      %25 = sbr.rel (0) target = $region9
    $region8: #{tpu_custom_call.1} parent=1 // pred_region
      %s27 = ssub.s32 1024, 1024
      %28 = vsyncadd [#allocation7], %s27
      %s29 = sshll.u32 [#allocation6], 4
      %s30 = int_to_ptr.vmem [resolvable:$true] %s29
      %35 = dma.hbm_to_vmem [thread:$0]  %s1, 1024, %s30, [#allocation7], 64, 64, 4
    $region9: #{tpu_custom_call.1} parent=1 // pred_fallthru
      _
    // Predicated region
    $region10: #{tpu_custom_call.1} parent=1 // pred_check
      _
    $region11: #{tpu_custom_call.1} parent=1 // pred_check_branch
      %37 = sbr.rel (0) target = $region13
    $region12: #{tpu_custom_call.1} parent=1 // pred_region
      %s39 = ssub.s32 2048, 2048
      %40 = vsyncadd [#allocation7], %s39
      %s41 = sshll.u32 [#allocation8], 4
      %s42 = int_to_ptr.vmem [resolvable:$true] %s41
      %47 = dma.hbm_to_vmem [thread:$0]  %s2, 2048, %s42, [#allocation7], 128, 128, 8
    $region13: #{tpu_custom_call.1} parent=1 // pred_fallthru
      _
    // Predicated region
    $region14: #{tpu_custom_call.1} parent=1 // pred_check
      _
    $region15: #{tpu_custom_call.1} parent=1 // pred_check_branch
      %49 = sbr.rel (0) target = $region17
    $region16: #{tpu_custom_call.1} parent=1 // pred_region
      _
    $region17: #{tpu_custom_call.1} parent=1 // pred_fallthru
      _
    // Predicated region
    $region18: #{tpu_custom_call.1} parent=1 // pred_check
      _
    $region19: #{tpu_custom_call.1} parent=1 // pred_check_branch
      %51 = sbr.rel (0) target = $region21
    $region20: #{tpu_custom_call.1} parent=1 // pred_region
      %52 = dma.done [#allocation4], 640
    $region21: #{tpu_custom_call.1} parent=1 // pred_fallthru
      _
    // Predicated region
    $region22: #{tpu_custom_call.1} parent=1 // pred_check
      _
    $region23: #{tpu_custom_call.1} parent=1 // pred_check_branch
      %54 = sbr.rel (0) target = $region25
    $region24: #{tpu_custom_call.1} parent=1 // pred_region
      %55 = dma.done [#allocation7], 1024
    $region25: #{tpu_custom_call.1} parent=1 // pred_fallthru
      _
    // Predicated region
    $region26: #{tpu_custom_call.1} parent=1 // pred_check
      _
    $region27: #{tpu_custom_call.1} parent=1 // pred_check_branch
      %57 = sbr.rel (0) target = $region29
    $region28: #{tpu_custom_call.1} parent=1 // pred_region
      %58 = dma.done [#allocation7], 2048
    $region29: #{tpu_custom_call.1} parent=1 // pred_fallthru
      _
    %p60 = scmp.eq.s32.totalorder 0, 0
    // Predicated region
    $region30: #{tpu_custom_call.1} parent=1 // pred_check
      %p61 = pneg %p60
    $region31: #{tpu_custom_call.1} parent=1 // pred_check_branch
      %63 = sbr.rel (%p61) target = $region33
    $region32: #{tpu_custom_call.1} parent=1 // pred_region
      %64 = vst [vmem:[#allocation2] sm:$0xff] 0.0
    $region33: #{tpu_custom_call.1} parent=1 // pred_fallthru
      _
    %v65 = vld [vmem:[#allocation3] sm:$0xff]
    %v66 = vld [vmem:[#allocation3 + $0x8] sm:$0xff]
    %v67 = vld [vmem:[#allocation3 + $0x10] sm:$0xff]
    %v68 = vld [vmem:[#allocation3 + $0x18] sm:$0xff]
    %v69 = vld [vmem:[#allocation3 + $0x20] sm:$0xff]
    %v70 = vpack.c.bf16 %v66, %v65
    %v71 = vpack.c.bf16 %v68, %v67
    %v72 = vpack.c.bf16 %v69, %v69
    %v73 = vld [vmem:[#allocation6] sm:$0xf]
    %v74 = vld [vmem:[#allocation6 + $0x4] sm:$0xf]
    %v75 = vld [vmem:[#allocation6 + $0x8] sm:$0xf]
    %v76 = vld [vmem:[#allocation6 + $0xc] sm:$0xf]
    %v77 = vld [vmem:[#allocation6 + $0x10] sm:$0xf]
    %v78 = vld [vmem:[#allocation6 + $0x14] sm:$0xf]
    %v79 = vld [vmem:[#allocation6 + $0x18] sm:$0xf]
    %v80 = vld [vmem:[#allocation6 + $0x1c] sm:$0xf]
    %v81 = vld [vmem:[#allocation6 + $0x20] sm:$0xf]
    %v82 = vld [vmem:[#allocation6 + $0x24] sm:$0xf]
    %v83 = vld [vmem:[#allocation6 + $0x28] sm:$0xf]
    %v84 = vld [vmem:[#allocation6 + $0x2c] sm:$0xf]
    %v85 = vld [vmem:[#allocation6 + $0x30] sm:$0xf]
    %v86 = vld [vmem:[#allocation6 + $0x34] sm:$0xf]
    %v87 = vld [vmem:[#allocation6 + $0x38] sm:$0xf]
    %v88 = vld [vmem:[#allocation6 + $0x3c] sm:$0xf]
    %v89 = vld [vmem:[%s3] sm:$0x1]
    %v91 = vlaneseq
    %v92 = vshrl.u32 %v91, 7
    %v93 = vsub.s32 0, %v92
    %v94 = vrot.slane %v89, %v93
    %v112 = vunpack.c.l.b16 %v73
    %v113 = vunpack.c.l.b16 %v74
    %v114 = vunpack.c.l.b16 %v75
    %v115 = vunpack.c.l.b16 %v76
    %v116 = vunpack.c.l.b16 %v77
    %v117 = vunpack.c.l.b16 %v78
    %v118 = vunpack.c.l.b16 %v79
    %v119 = vunpack.c.l.b16 %v80
    %v120 = vunpack.c.l.b16 %v81
    %v121 = vunpack.c.l.b16 %v82
    %v122 = vunpack.c.l.b16 %v83
    %v123 = vunpack.c.l.b16 %v84
    %v124 = vunpack.c.l.b16 %v85
    %v125 = vunpack.c.l.b16 %v86
    %v126 = vunpack.c.l.b16 %v87
    %v127 = vunpack.c.l.b16 %v88
    %v128 = vpack.c.b16 %v113, %v112
    %v129 = vpack.c.b16 %v115, %v114
    %v130 = vpack.c.b16 %v117, %v116
    %v131 = vpack.c.b16 %v119, %v118
    %v132 = vpack.c.b16 %v121, %v120
    %v133 = vpack.c.b16 %v123, %v122
    %v134 = vpack.c.b16 %v125, %v124
    %v135 = vpack.c.b16 %v127, %v126
    %144 = vmatprep.subr.bf16.mxu0 0
    %145 = vmatpush1.bf16.msra.mxu0 %v128
    %146 = vmatprep.subr.bf16.mxu0 0
    %147 = vmatpush1.bf16.msra.mxu0 %v129
    %148 = vmatprep.subr.bf16.mxu0 0
    %149 = vmatpush1.bf16.msra.mxu0 %v130
    %150 = vmatprep.subr.bf16.mxu0 0
    %151 = vmatpush1.bf16.msra.mxu0 %v131
    %152 = vmatprep.subr.bf16.mxu0 0
    %153 = vmatpush1.bf16.msra.mxu0 %v132
    %154 = vmatprep.subr.bf16.mxu0 0
    %155 = vmatpush1.bf16.msra.mxu0 %v133
    %156 = vmatprep.subr.bf16.mxu0 0
    %157 = vmatpush1.bf16.msra.mxu0 %v134
    %158 = vmatprep.subr.bf16.mxu0 0
    %159 = vmatpush1.bf16.msra.mxu0 %v135
    %160 = vmatprep.subr.bf16.mxu0 0
    %161 = vmatpush1.bf16.msra.mxu0 0
    %162 = vmatprep.subr.bf16.mxu0 0
    %163 = vmatpush1.bf16.msra.mxu0 0
    %164 = vmatprep.subr.bf16.mxu0 0
    %165 = vmatpush1.bf16.msra.mxu0 0
    %166 = vmatprep.subr.bf16.mxu0 0
    %167 = vmatpush1.bf16.msra.mxu0 0
    %168 = vmatprep.subr.bf16.mxu0 0
    %169 = vmatpush1.bf16.msra.mxu0 0
    %170 = vmatprep.subr.bf16.mxu0 0
    %171 = vmatpush1.bf16.msra.mxu0 0
    %172 = vmatprep.subr.bf16.mxu0 0
    %173 = vmatpush1.bf16.msra.mxu0 0
    %174 = vmatprep.subr.bf16.mxu0 0
    %175 = vmatpush1.bf16.msra.mxu0 0
    %176 = vmatprep.mubr.bf16.mxu0 0
    %177 = vmatmul.mubr.bf16.gmra.mrb[0].mxu0 %v70
    %v178 = vpop.f32.mrb[0].mxu0
    %v179 = vadd.f32 %v94, %v178
    %v180 = vpop.f32.mrb[0].mxu0
    %v181 = vpop.f32.mrb[0].mxu0
    %v182 = vadd.f32 %v94, %v181
    %v183 = vpop.f32.mrb[0].mxu0
    %184 = vmatprep.mubr.bf16.mxu0 0
    %185 = vmatmul.mubr.bf16.gmra.mrb[0].mxu0 %v71
    %v186 = vpop.f32.mrb[0].mxu0
    %v187 = vadd.f32 %v94, %v186
    %v188 = vpop.f32.mrb[0].mxu0
    %v189 = vpop.f32.mrb[0].mxu0
    %v190 = vadd.f32 %v94, %v189
    %v191 = vpop.f32.mrb[0].mxu0
    %192 = vmatprep.mubr.bf16.mxu0 0
    %193 = vmatmul.mubr.bf16.gmra.mrb[0].mxu0 %v72
    %v194 = vpop.f32.mrb[0].mxu0
    %v195 = vadd.f32 %v94, %v194
    %v196 = vpop.f32.mrb[0].mxu0
    %v197 = vpop.f32.mrb[0].mxu0
    %v198 = vpop.f32.mrb[0].mxu0
    %199 = vdwg.mxu0
    %200 = vst [vmem:[#allocation9] sm:$0xff] %v179
    %201 = vst [vmem:[#allocation9 + $0x8] sm:$0xff] %v182
    %202 = vst [vmem:[#allocation9 + $0x10] sm:$0xff] %v187
    %203 = vst [vmem:[#allocation9 + $0x18] sm:$0xff] %v190
    %204 = vst [vmem:[#allocation9 + $0x20] sm:$0xff] %v195
    %v205 = vld [vmem:[#allocation2] sm:$0xff]
    %v206 = vld [vmem:[#allocation9] sm:$0xff]
    %v207 = vld [vmem:[#allocation8] sm:$0xff]
    %v208 = vld [vmem:[#allocation8 + $0x8] sm:$0xff]
    %v209 = vld [vmem:[#allocation8 + $0x10] sm:$0xff]
    %v210 = vld [vmem:[#allocation8 + $0x18] sm:$0xff]
    %v211 = vld [vmem:[#allocation8 + $0x20] sm:$0xff]
    %v212 = vld [vmem:[#allocation8 + $0x28] sm:$0xff]
    %v213 = vld [vmem:[#allocation8 + $0x30] sm:$0xff]
    %v214 = vld [vmem:[#allocation8 + $0x38] sm:$0xff]
    %v215 = vld [vmem:[#allocation8 + $0x40] sm:$0xff]
    %v216 = vld [vmem:[#allocation8 + $0x48] sm:$0xff]
    %v217 = vld [vmem:[#allocation8 + $0x50] sm:$0xff]
    %v218 = vld [vmem:[#allocation8 + $0x58] sm:$0xff]
    %v219 = vld [vmem:[#allocation8 + $0x60] sm:$0xff]
    %v220 = vld [vmem:[#allocation8 + $0x68] sm:$0xff]
    %v221 = vld [vmem:[#allocation8 + $0x70] sm:$0xff]
    %v222 = vld [vmem:[#allocation8 + $0x78] sm:$0xff]
    %223 = vmatprep.subr.mxu0 0.0
    %224 = vmatpush1.msra.mxu0 %v207
    %225 = vmatprep.subr.mxu0 0.0
    %226 = vmatpush1.msra.mxu0 %v208
    %227 = vmatprep.subr.mxu0 0.0
    %228 = vmatpush1.msra.mxu0 %v209
    %229 = vmatprep.subr.mxu0 0.0
    %230 = vmatpush1.msra.mxu0 %v210
    %231 = vmatprep.subr.mxu0 0.0
    %232 = vmatpush1.msra.mxu0 %v211
    %233 = vmatprep.subr.mxu0 0.0
    %234 = vmatpush1.msra.mxu0 %v212
    %235 = vmatprep.subr.mxu0 0.0
    %236 = vmatpush1.msra.mxu0 %v213
    %237 = vmatprep.subr.mxu0 0.0
    %238 = vmatpush1.msra.mxu0 %v214
    %239 = vmatprep.subr.mxu0 0.0
    %240 = vmatpush1.msra.mxu0 %v215
    %241 = vmatprep.subr.mxu0 0.0
    %242 = vmatpush1.msra.mxu0 %v216
    %243 = vmatprep.subr.mxu0 0.0
    %244 = vmatpush1.msra.mxu0 %v217
    %245 = vmatprep.subr.mxu0 0.0
    %246 = vmatpush1.msra.mxu0 %v218
    %247 = vmatprep.subr.mxu0 0.0
    %248 = vmatpush1.msra.mxu0 %v219
    %249 = vmatprep.subr.mxu0 0.0
    %250 = vmatpush1.msra.mxu0 %v220
    %251 = vmatprep.subr.mxu0 0.0
    %252 = vmatpush1.msra.mxu0 %v221
    %253 = vmatprep.subr.mxu0 0.0
    %254 = vmatpush1.msra.mxu0 %v222
    %255 = vmatprep.subr.mxu0 0.0
    %256 = vmatpush1.msra.mxu0 0.0
    %257 = vmatprep.subr.mxu0 0.0
    %258 = vmatpush1.msra.mxu0 0.0
    %259 = vmatprep.subr.mxu0 0.0
    %260 = vmatpush1.msra.mxu0 0.0
    %261 = vmatprep.subr.mxu0 0.0
    %262 = vmatpush1.msra.mxu0 0.0
    %263 = vmatprep.subr.mxu0 0.0
    %264 = vmatpush1.msra.mxu0 0.0
    %265 = vmatprep.subr.mxu0 0.0
    %266 = vmatpush1.msra.mxu0 0.0
    %267 = vmatprep.subr.mxu0 0.0
    %268 = vmatpush1.msra.mxu0 0.0
    %269 = vmatprep.subr.mxu0 0.0
    %270 = vmatpush1.msra.mxu0 0.0
    %271 = vmatprep.subr.mxu0 0.0
    %272 = vmatpush1.msra.mxu0 0.0
    %273 = vmatprep.subr.mxu0 0.0
    %274 = vmatpush1.msra.mxu0 0.0
    %275 = vmatprep.subr.mxu0 0.0
    %276 = vmatpush1.msra.mxu0 0.0
    %277 = vmatprep.subr.mxu0 0.0
    %278 = vmatpush1.msra.mxu0 0.0
    %279 = vmatprep.subr.mxu0 0.0
    %280 = vmatpush1.msra.mxu0 0.0
    %281 = vmatprep.subr.mxu0 0.0
    %282 = vmatpush1.msra.mxu0 0.0
    %283 = vmatprep.subr.mxu0 0.0
    %284 = vmatpush1.msra.mxu0 0.0
    %285 = vmatprep.subr.mxu0 0.0
    %286 = vmatpush1.msra.mxu0 0.0
    %287 = vmatprep.mubr.f32.mxu0 0.0
    %288 = vmatmul.mubr.f32.gmra.mrb[0].mxu0 %v205
    %v289 = vpop.f32.mrb[0].mxu0
    %v290 = vadd.f32 0.0, %v289
    %v291 = vpop.f32.mrb[0].mxu0
    %292 = vdwg.mxu0
    %v293 = vadd.f32 %v206, %v290
    %v294 = vtanh.pop %v293
    %295 = vst [vmem:[#allocation9] sm:$0xff] %v294
    %s296 = scalar_lea.vmem [#allocation9], 8
    %v297 = vld [vmem:[%s296] sm:$0xff]
    %v298 = vld [vmem:[#allocation8] sm:$0xff]
    %v299 = vld [vmem:[#allocation8 + $0x8] sm:$0xff]
    %v300 = vld [vmem:[#allocation8 + $0x10] sm:$0xff]
    %v301 = vld [vmem:[#allocation8 + $0x18] sm:$0xff]
    %v302 = vld [vmem:[#allocation8 + $0x20] sm:$0xff]
    %v303 = vld [vmem:[#allocation8 + $0x28] sm:$0xff]
    %v304 = vld [vmem:[#allocation8 + $0x30] sm:$0xff]
    %v305 = vld [vmem:[#allocation8 + $0x38] sm:$0xff]
    %v306 = vld [vmem:[#allocation8 + $0x40] sm:$0xff]
    %v307 = vld [vmem:[#allocation8 + $0x48] sm:$0xff]
    %v308 = vld [vmem:[#allocation8 + $0x50] sm:$0xff]
    %v309 = vld [vmem:[#allocation8 + $0x58] sm:$0xff]
    %v310 = vld [vmem:[#allocation8 + $0x60] sm:$0xff]
    %v311 = vld [vmem:[#allocation8 + $0x68] sm:$0xff]
    %v312 = vld [vmem:[#allocation8 + $0x70] sm:$0xff]
    %v313 = vld [vmem:[#allocation8 + $0x78] sm:$0xff]
    %314 = vmatprep.subr.mxu0 0.0
    %315 = vmatpush1.msra.mxu0 %v298
    %316 = vmatprep.subr.mxu0 0.0
    %317 = vmatpush1.msra.mxu0 %v299
    %318 = vmatprep.subr.mxu0 0.0
    %319 = vmatpush1.msra.mxu0 %v300
    %320 = vmatprep.subr.mxu0 0.0
    %321 = vmatpush1.msra.mxu0 %v301
    %322 = vmatprep.subr.mxu0 0.0
    %323 = vmatpush1.msra.mxu0 %v302
    %324 = vmatprep.subr.mxu0 0.0
    %325 = vmatpush1.msra.mxu0 %v303
    %326 = vmatprep.subr.mxu0 0.0
    %327 = vmatpush1.msra.mxu0 %v304
    %328 = vmatprep.subr.mxu0 0.0
    %329 = vmatpush1.msra.mxu0 %v305
    %330 = vmatprep.subr.mxu0 0.0
    %331 = vmatpush1.msra.mxu0 %v306
    %332 = vmatprep.subr.mxu0 0.0
    %333 = vmatpush1.msra.mxu0 %v307
    %334 = vmatprep.subr.mxu0 0.0
    %335 = vmatpush1.msra.mxu0 %v308
    %336 = vmatprep.subr.mxu0 0.0
    %337 = vmatpush1.msra.mxu0 %v309
    %338 = vmatprep.subr.mxu0 0.0
    %339 = vmatpush1.msra.mxu0 %v310
    %340 = vmatprep.subr.mxu0 0.0
    %341 = vmatpush1.msra.mxu0 %v311
    %342 = vmatprep.subr.mxu0 0.0
    %343 = vmatpush1.msra.mxu0 %v312
    %344 = vmatprep.subr.mxu0 0.0
    %345 = vmatpush1.msra.mxu0 %v313
    %346 = vmatprep.subr.mxu0 0.0
    %347 = vmatpush1.msra.mxu0 0.0
    %348 = vmatprep.subr.mxu0 0.0
    %349 = vmatpush1.msra.mxu0 0.0
    %350 = vmatprep.subr.mxu0 0.0
    %351 = vmatpush1.msra.mxu0 0.0
    %352 = vmatprep.subr.mxu0 0.0
    %353 = vmatpush1.msra.mxu0 0.0
    %354 = vmatprep.subr.mxu0 0.0
    %355 = vmatpush1.msra.mxu0 0.0
    %356 = vmatprep.subr.mxu0 0.0
    %357 = vmatpush1.msra.mxu0 0.0
    %358 = vmatprep.subr.mxu0 0.0
    %359 = vmatpush1.msra.mxu0 0.0
    %360 = vmatprep.subr.mxu0 0.0
    %361 = vmatpush1.msra.mxu0 0.0
    %362 = vmatprep.subr.mxu0 0.0
    %363 = vmatpush1.msra.mxu0 0.0
    %364 = vmatprep.subr.mxu0 0.0
    %365 = vmatpush1.msra.mxu0 0.0
    %366 = vmatprep.subr.mxu0 0.0
    %367 = vmatpush1.msra.mxu0 0.0
    %368 = vmatprep.subr.mxu0 0.0
    %369 = vmatpush1.msra.mxu0 0.0
    %370 = vmatprep.subr.mxu0 0.0
    %371 = vmatpush1.msra.mxu0 0.0
    %372 = vmatprep.subr.mxu0 0.0
    %373 = vmatpush1.msra.mxu0 0.0
    %374 = vmatprep.subr.mxu0 0.0
    %375 = vmatpush1.msra.mxu0 0.0
    %376 = vmatprep.subr.mxu0 0.0
    %377 = vmatpush1.msra.mxu0 0.0
    %378 = vmatprep.mubr.f32.mxu0 0.0
    %379 = vmatmul.mubr.f32.gmra.mrb[0].mxu0 %v294
    %v380 = vpop.f32.mrb[0].mxu0
    %v381 = vadd.f32 0.0, %v380
    %v382 = vpop.f32.mrb[0].mxu0
    %383 = vdwg.mxu0
    %v384 = vadd.f32 %v297, %v381
    %v385 = vtanh.pop %v384
    %386 = vst [vmem:[%s296] sm:$0xff] %v385
    %s387 = scalar_lea.vmem [#allocation9], 16
    %v388 = vld [vmem:[%s387] sm:$0xff]
    %v389 = vld [vmem:[#allocation8] sm:$0xff]
    %v390 = vld [vmem:[#allocation8 + $0x8] sm:$0xff]
    %v391 = vld [vmem:[#allocation8 + $0x10] sm:$0xff]
    %v392 = vld [vmem:[#allocation8 + $0x18] sm:$0xff]
    %v393 = vld [vmem:[#allocation8 + $0x20] sm:$0xff]
    %v394 = vld [vmem:[#allocation8 + $0x28] sm:$0xff]
    %v395 = vld [vmem:[#allocation8 + $0x30] sm:$0xff]
    %v396 = vld [vmem:[#allocation8 + $0x38] sm:$0xff]
    %v397 = vld [vmem:[#allocation8 + $0x40] sm:$0xff]
    %v398 = vld [vmem:[#allocation8 + $0x48] sm:$0xff]
    %v399 = vld [vmem:[#allocation8 + $0x50] sm:$0xff]
    %v400 = vld [vmem:[#allocation8 + $0x58] sm:$0xff]
    %v401 = vld [vmem:[#allocation8 + $0x60] sm:$0xff]
    %v402 = vld [vmem:[#allocation8 + $0x68] sm:$0xff]
    %v403 = vld [vmem:[#allocation8 + $0x70] sm:$0xff]
    %v404 = vld [vmem:[#allocation8 + $0x78] sm:$0xff]
    %405 = vmatprep.subr.mxu0 0.0
    %406 = vmatpush1.msra.mxu0 %v389
    %407 = vmatprep.subr.mxu0 0.0
    %408 = vmatpush1.msra.mxu0 %v390
    %409 = vmatprep.subr.mxu0 0.0
    %410 = vmatpush1.msra.mxu0 %v391
    %411 = vmatprep.subr.mxu0 0.0
    %412 = vmatpush1.msra.mxu0 %v392
    %413 = vmatprep.subr.mxu0 0.0
    %414 = vmatpush1.msra.mxu0 %v393
    %415 = vmatprep.subr.mxu0 0.0
    %416 = vmatpush1.msra.mxu0 %v394
    %417 = vmatprep.subr.mxu0 0.0
    %418 = vmatpush1.msra.mxu0 %v395
    %419 = vmatprep.subr.mxu0 0.0
    %420 = vmatpush1.msra.mxu0 %v396
    %421 = vmatprep.subr.mxu0 0.0
    %422 = vmatpush1.msra.mxu0 %v397
    %423 = vmatprep.subr.mxu0 0.0
    %424 = vmatpush1.msra.mxu0 %v398
    %425 = vmatprep.subr.mxu0 0.0
    %426 = vmatpush1.msra.mxu0 %v399
    %427 = vmatprep.subr.mxu0 0.0
    %428 = vmatpush1.msra.mxu0 %v400
    %429 = vmatprep.subr.mxu0 0.0
    %430 = vmatpush1.msra.mxu0 %v401
    %431 = vmatprep.subr.mxu0 0.0
    %432 = vmatpush1.msra.mxu0 %v402
    %433 = vmatprep.subr.mxu0 0.0
    %434 = vmatpush1.msra.mxu0 %v403
    %435 = vmatprep.subr.mxu0 0.0
    %436 = vmatpush1.msra.mxu0 %v404
    %437 = vmatprep.subr.mxu0 0.0
    %438 = vmatpush1.msra.mxu0 0.0
    %439 = vmatprep.subr.mxu0 0.0
    %440 = vmatpush1.msra.mxu0 0.0
    %441 = vmatprep.subr.mxu0 0.0
    %442 = vmatpush1.msra.mxu0 0.0
    %443 = vmatprep.subr.mxu0 0.0
    %444 = vmatpush1.msra.mxu0 0.0
    %445 = vmatprep.subr.mxu0 0.0
    %446 = vmatpush1.msra.mxu0 0.0
    %447 = vmatprep.subr.mxu0 0.0
    %448 = vmatpush1.msra.mxu0 0.0
    %449 = vmatprep.subr.mxu0 0.0
    %450 = vmatpush1.msra.mxu0 0.0
    %451 = vmatprep.subr.mxu0 0.0
    %452 = vmatpush1.msra.mxu0 0.0
    %453 = vmatprep.subr.mxu0 0.0
    %454 = vmatpush1.msra.mxu0 0.0
    %455 = vmatprep.subr.mxu0 0.0
    %456 = vmatpush1.msra.mxu0 0.0
    %457 = vmatprep.subr.mxu0 0.0
    %458 = vmatpush1.msra.mxu0 0.0
    %459 = vmatprep.subr.mxu0 0.0
    %460 = vmatpush1.msra.mxu0 0.0
    %461 = vmatprep.subr.mxu0 0.0
    %462 = vmatpush1.msra.mxu0 0.0
    %463 = vmatprep.subr.mxu0 0.0
    %464 = vmatpush1.msra.mxu0 0.0
    %465 = vmatprep.subr.mxu0 0.0
    %466 = vmatpush1.msra.mxu0 0.0
    %467 = vmatprep.subr.mxu0 0.0
    %468 = vmatpush1.msra.mxu0 0.0
    %469 = vmatprep.mubr.f32.mxu0 0.0
    %470 = vmatmul.mubr.f32.gmra.mrb[0].mxu0 %v385
    %v471 = vpop.f32.mrb[0].mxu0
    %v472 = vadd.f32 0.0, %v471
    %v473 = vpop.f32.mrb[0].mxu0
    %474 = vdwg.mxu0
    %v475 = vadd.f32 %v388, %v472
    %v476 = vtanh.pop %v475
    %477 = vst [vmem:[%s387] sm:$0xff] %v476
    %s478 = scalar_lea.vmem [#allocation9], 24
    %v479 = vld [vmem:[%s478] sm:$0xff]
    %v480 = vld [vmem:[#allocation8] sm:$0xff]
    %v481 = vld [vmem:[#allocation8 + $0x8] sm:$0xff]
    %v482 = vld [vmem:[#allocation8 + $0x10] sm:$0xff]
    %v483 = vld [vmem:[#allocation8 + $0x18] sm:$0xff]
    %v484 = vld [vmem:[#allocation8 + $0x20] sm:$0xff]
    %v485 = vld [vmem:[#allocation8 + $0x28] sm:$0xff]
    %v486 = vld [vmem:[#allocation8 + $0x30] sm:$0xff]
    %v487 = vld [vmem:[#allocation8 + $0x38] sm:$0xff]
    %v488 = vld [vmem:[#allocation8 + $0x40] sm:$0xff]
    %v489 = vld [vmem:[#allocation8 + $0x48] sm:$0xff]
    %v490 = vld [vmem:[#allocation8 + $0x50] sm:$0xff]
    %v491 = vld [vmem:[#allocation8 + $0x58] sm:$0xff]
    %v492 = vld [vmem:[#allocation8 + $0x60] sm:$0xff]
    %v493 = vld [vmem:[#allocation8 + $0x68] sm:$0xff]
    %v494 = vld [vmem:[#allocation8 + $0x70] sm:$0xff]
    %v495 = vld [vmem:[#allocation8 + $0x78] sm:$0xff]
    %496 = vmatprep.subr.mxu0 0.0
    %497 = vmatpush1.msra.mxu0 %v480
    %498 = vmatprep.subr.mxu0 0.0
    %499 = vmatpush1.msra.mxu0 %v481
    %500 = vmatprep.subr.mxu0 0.0
    %501 = vmatpush1.msra.mxu0 %v482
    %502 = vmatprep.subr.mxu0 0.0
    %503 = vmatpush1.msra.mxu0 %v483
    %504 = vmatprep.subr.mxu0 0.0
    %505 = vmatpush1.msra.mxu0 %v484
    %506 = vmatprep.subr.mxu0 0.0
    %507 = vmatpush1.msra.mxu0 %v485
    %508 = vmatprep.subr.mxu0 0.0
    %509 = vmatpush1.msra.mxu0 %v486
    %510 = vmatprep.subr.mxu0 0.0
    %511 = vmatpush1.msra.mxu0 %v487
    %512 = vmatprep.subr.mxu0 0.0
    %513 = vmatpush1.msra.mxu0 %v488
    %514 = vmatprep.subr.mxu0 0.0
    %515 = vmatpush1.msra.mxu0 %v489
    %516 = vmatprep.subr.mxu0 0.0
    %517 = vmatpush1.msra.mxu0 %v490
    %518 = vmatprep.subr.mxu0 0.0
    %519 = vmatpush1.msra.mxu0 %v491
    %520 = vmatprep.subr.mxu0 0.0
    %521 = vmatpush1.msra.mxu0 %v492
    %522 = vmatprep.subr.mxu0 0.0
    %523 = vmatpush1.msra.mxu0 %v493
    %524 = vmatprep.subr.mxu0 0.0
    %525 = vmatpush1.msra.mxu0 %v494
    %526 = vmatprep.subr.mxu0 0.0
    %527 = vmatpush1.msra.mxu0 %v495
    %528 = vmatprep.subr.mxu0 0.0
    %529 = vmatpush1.msra.mxu0 0.0
    %530 = vmatprep.subr.mxu0 0.0
    %531 = vmatpush1.msra.mxu0 0.0
    %532 = vmatprep.subr.mxu0 0.0
    %533 = vmatpush1.msra.mxu0 0.0
    %534 = vmatprep.subr.mxu0 0.0
    %535 = vmatpush1.msra.mxu0 0.0
    %536 = vmatprep.subr.mxu0 0.0
    %537 = vmatpush1.msra.mxu0 0.0
    %538 = vmatprep.subr.mxu0 0.0
    %539 = vmatpush1.msra.mxu0 0.0
    %540 = vmatprep.subr.mxu0 0.0
    %541 = vmatpush1.msra.mxu0 0.0
    %542 = vmatprep.subr.mxu0 0.0
    %543 = vmatpush1.msra.mxu0 0.0
    %544 = vmatprep.subr.mxu0 0.0
    %545 = vmatpush1.msra.mxu0 0.0
    %546 = vmatprep.subr.mxu0 0.0
    %547 = vmatpush1.msra.mxu0 0.0
    %548 = vmatprep.subr.mxu0 0.0
    %549 = vmatpush1.msra.mxu0 0.0
    %550 = vmatprep.subr.mxu0 0.0
    %551 = vmatpush1.msra.mxu0 0.0
    %552 = vmatprep.subr.mxu0 0.0
    %553 = vmatpush1.msra.mxu0 0.0
    %554 = vmatprep.subr.mxu0 0.0
    %555 = vmatpush1.msra.mxu0 0.0
    %556 = vmatprep.subr.mxu0 0.0
    %557 = vmatpush1.msra.mxu0 0.0
    %558 = vmatprep.subr.mxu0 0.0
    %559 = vmatpush1.msra.mxu0 0.0
    %560 = vmatprep.mubr.f32.mxu0 0.0
    %561 = vmatmul.mubr.f32.gmra.mrb[0].mxu0 %v476
    %v562 = vpop.f32.mrb[0].mxu0
    %v563 = vadd.f32 0.0, %v562
    %v564 = vpop.f32.mrb[0].mxu0
    %565 = vdwg.mxu0
    %v566 = vadd.f32 %v479, %v563
    %v567 = vtanh.pop %v566
    %568 = vst [vmem:[%s478] sm:$0xff] %v567
    %s569 = scalar_lea.vmem [#allocation9], 32
    %v570 = vld [vmem:[%s569] sm:$0xff]
    %v571 = vld [vmem:[#allocation8] sm:$0xff]
    %v572 = vld [vmem:[#allocation8 + $0x8] sm:$0xff]
    %v573 = vld [vmem:[#allocation8 + $0x10] sm:$0xff]
    %v574 = vld [vmem:[#allocation8 + $0x18] sm:$0xff]
    %v575 = vld [vmem:[#allocation8 + $0x20] sm:$0xff]
    %v576 = vld [vmem:[#allocation8 + $0x28] sm:$0xff]
    %v577 = vld [vmem:[#allocation8 + $0x30] sm:$0xff]
    %v578 = vld [vmem:[#allocation8 + $0x38] sm:$0xff]
    %v579 = vld [vmem:[#allocation8 + $0x40] sm:$0xff]
    %v580 = vld [vmem:[#allocation8 + $0x48] sm:$0xff]
    %v581 = vld [vmem:[#allocation8 + $0x50] sm:$0xff]
    %v582 = vld [vmem:[#allocation8 + $0x58] sm:$0xff]
    %v583 = vld [vmem:[#allocation8 + $0x60] sm:$0xff]
    %v584 = vld [vmem:[#allocation8 + $0x68] sm:$0xff]
    %v585 = vld [vmem:[#allocation8 + $0x70] sm:$0xff]
    %v586 = vld [vmem:[#allocation8 + $0x78] sm:$0xff]
    %587 = vmatprep.subr.mxu0 0.0
    %588 = vmatpush1.msra.mxu0 %v571
    %589 = vmatprep.subr.mxu0 0.0
    %590 = vmatpush1.msra.mxu0 %v572
    %591 = vmatprep.subr.mxu0 0.0
    %592 = vmatpush1.msra.mxu0 %v573
    %593 = vmatprep.subr.mxu0 0.0
    %594 = vmatpush1.msra.mxu0 %v574
    %595 = vmatprep.subr.mxu0 0.0
    %596 = vmatpush1.msra.mxu0 %v575
    %597 = vmatprep.subr.mxu0 0.0
    %598 = vmatpush1.msra.mxu0 %v576
    %599 = vmatprep.subr.mxu0 0.0
    %600 = vmatpush1.msra.mxu0 %v577
    %601 = vmatprep.subr.mxu0 0.0
    %602 = vmatpush1.msra.mxu0 %v578
    %603 = vmatprep.subr.mxu0 0.0
    %604 = vmatpush1.msra.mxu0 %v579
    %605 = vmatprep.subr.mxu0 0.0
    %606 = vmatpush1.msra.mxu0 %v580
    %607 = vmatprep.subr.mxu0 0.0
    %608 = vmatpush1.msra.mxu0 %v581
    %609 = vmatprep.subr.mxu0 0.0
    %610 = vmatpush1.msra.mxu0 %v582
    %611 = vmatprep.subr.mxu0 0.0
    %612 = vmatpush1.msra.mxu0 %v583
    %613 = vmatprep.subr.mxu0 0.0
    %614 = vmatpush1.msra.mxu0 %v584
    %615 = vmatprep.subr.mxu0 0.0
    %616 = vmatpush1.msra.mxu0 %v585
    %617 = vmatprep.subr.mxu0 0.0
    %618 = vmatpush1.msra.mxu0 %v586
    %619 = vmatprep.subr.mxu0 0.0
    %620 = vmatpush1.msra.mxu0 0.0
    %621 = vmatprep.subr.mxu0 0.0
    %622 = vmatpush1.msra.mxu0 0.0
    %623 = vmatprep.subr.mxu0 0.0
    %624 = vmatpush1.msra.mxu0 0.0
    %625 = vmatprep.subr.mxu0 0.0
    %626 = vmatpush1.msra.mxu0 0.0
    %627 = vmatprep.subr.mxu0 0.0
    %628 = vmatpush1.msra.mxu0 0.0
    %629 = vmatprep.subr.mxu0 0.0
    %630 = vmatpush1.msra.mxu0 0.0
    %631 = vmatprep.subr.mxu0 0.0
    %632 = vmatpush1.msra.mxu0 0.0
    %633 = vmatprep.subr.mxu0 0.0
    %634 = vmatpush1.msra.mxu0 0.0
    %635 = vmatprep.subr.mxu0 0.0
    %636 = vmatpush1.msra.mxu0 0.0
    %637 = vmatprep.subr.mxu0 0.0
    %638 = vmatpush1.msra.mxu0 0.0
    %639 = vmatprep.subr.mxu0 0.0
    %640 = vmatpush1.msra.mxu0 0.0
    %641 = vmatprep.subr.mxu0 0.0
    %642 = vmatpush1.msra.mxu0 0.0
    %643 = vmatprep.subr.mxu0 0.0
    %644 = vmatpush1.msra.mxu0 0.0
    %645 = vmatprep.subr.mxu0 0.0
    %646 = vmatpush1.msra.mxu0 0.0
    %647 = vmatprep.subr.mxu0 0.0
    %648 = vmatpush1.msra.mxu0 0.0
    %649 = vmatprep.subr.mxu0 0.0
    %650 = vmatpush1.msra.mxu0 0.0
    %651 = vmatprep.mubr.f32.mxu0 0.0
    %652 = vmatmul.mubr.f32.gmra.mrb[0].mxu0 %v567
    %v653 = vpop.f32.mrb[0].mxu0
    %v654 = vadd.f32 0.0, %v653
    %v655 = vpop.f32.mrb[0].mxu0
    %656 = vdwg.mxu0
    %v657 = vadd.f32 %v570, %v654
    %v658 = vtanh.pop %v657
    %659 = vst [vmem:[%s569] sm:$0xff] %v658
    %660 = vst [vmem:[#allocation2] sm:$0xff] %v658
    // Predicated region
    $region34: #{tpu_custom_call.1} parent=1 // pred_check
      _
    $region35: #{tpu_custom_call.1} parent=1 // pred_check_branch
      %662 = sbr.rel (0) target = $region37
    $region36: #{tpu_custom_call.1} parent=1 // pred_region
      %s664 = ssub.s32 640, 640
      %665 = vsyncadd [#allocation5], %s664
      %s666 = sshll.u32 [#allocation9], 4
      %s667 = int_to_ptr.vmem [resolvable:$true] %s666
      %672 = dma.vmem_to_hbm [thread:$0]  %s667, 640, %s4, [#allocation5], 128, 128, 8
    $region37: #{tpu_custom_call.1} parent=1 // pred_fallthru
      _
    // Predicated region
    $region38: #{tpu_custom_call.1} parent=1 // pred_check
      _
    $region39: #{tpu_custom_call.1} parent=1 // pred_check_branch
      %674 = sbr.rel (0) target = $region41
    $region40: #{tpu_custom_call.1} parent=1 // pred_region
      %675 = dma.done [#allocation5], 640
    $region41: #{tpu_custom_call.1} parent=1 // pred_fallthru
      _
    %676 = vsyncpa [#allocation4], 1
    %677 = vsyncpa [#allocation7], 1
    %678 = vsyncpa [#allocation5], 1

</llo_original>
